<compile_context>
chip_gen: v7x
topology: tpu7x:2x2x1
jax: 0.10.0
libtpu: 0.0.40
codegen_flags: <defaults>
</compile_context>

<pallas_src>
import jax
import jax.numpy as jnp
from jax.experimental import pallas as pl
from jax.experimental.pallas import tpu as pltpu

EPS = 1e-5
_LANE = 128


def _add_instnorm_kernel(x1_ref, x2_ref, w_ref, b_ref, o_ref):
    # x1_ref / x2_ref / o_ref: (TB, S, TD); w_ref / b_ref: (1, TD)
    x = x1_ref[...].astype(jnp.float32) + x2_ref[...].astype(jnp.float32)

    # Fused single-pass statistics over the seq axis (axis=1, sublane axis).
    inv_n = jnp.float32(1.0 / x1_ref.shape[1])
    s = jnp.sum(x, axis=1, keepdims=True)             # (TB, 1, TD)
    ss = jnp.sum(x * x, axis=1, keepdims=True)        # (TB, 1, TD)
    mean = s * inv_n
    var = jnp.maximum(ss * inv_n - mean * mean, 0.0)  # biased variance, clamp fp error

    # Fold normalization + affine into one per-channel scale/shift.
    w = w_ref[...].astype(jnp.float32)[None]          # (1, 1, TD)
    b = b_ref[...].astype(jnp.float32)[None]          # (1, 1, TD)
    scale = w * jax.lax.rsqrt(var + EPS)              # (TB, 1, TD)
    shift = b - mean * scale                          # (TB, 1, TD)

    o_ref[...] = (x * scale + shift).astype(o_ref.dtype)


def _vmem_capacity_bytes():
    try:
        cap = pltpu.get_tpu_info().vmem_capacity_bytes
        if cap:
            return cap
    except Exception:
        pass
    return 64 << 20  # assume smallest (v7x per-TC) if the query is unavailable


def _largest_divisor_leq(n, cap):
    best = 1
    for d in range(1, n + 1):
        if n % d == 0 and d <= cap:
            best = d
    return best


def _tile_plan(batch, seq, d, itemsize, budget):
    """Pick (TB, TD) so the double-buffered working set stays inside `budget`."""
    # Per tile element: 2 inputs x 2 pipeline buffers + 1 output x 2 buffers,
    # plus ~4 bytes slack for the f32 intermediate / spills.
    bytes_per_elem = 6 * itemsize + 4

    if d % _LANE == 0:
        # Largest multiple of 128 dividing D whose (TB=1) working set fits.
        per_lane = max(seq * bytes_per_elem, 1)
        max_lanes = max(_LANE, budget // per_lane)
        td = _LANE
        cand = _LANE
        while cand <= d:
            if d % cand == 0 and cand <= max_lanes:
                td = cand
            cand += _LANE
    else:
        # Full channel dim: avoids pad/slice HBM passes; masked stores are fine.
        # TODO(synk): for very large non-128-multiple D this may exceed VMEM;
        # a pad-to-128 fallback would be needed there.
        td = d

    per_batch = max(seq * td * bytes_per_elem, 1)
    tb = _largest_divisor_leq(batch, max(1, budget // per_batch))
    return tb, td


def add_and_instance_norm(x1, x2, weight, bias):
    """x1, x2: (B, S, D); weight, bias: (D,). Returns (B, S, D)."""
    B, S, D = x1.shape

    cap = _vmem_capacity_bytes()
    budget = min(cap // 3, 32 << 20)
    itemsize = jnp.dtype(x1.dtype).itemsize
    tb, td = _tile_plan(B, S, D, itemsize, budget)

    w2 = weight.reshape(1, D).astype(jnp.float32)
    b2 = bias.reshape(1, D).astype(jnp.float32)

    grid = (B // tb, D // td)
    vmem_limit = min(3 * cap // 4, 96 << 20)

    return pl.pallas_call(
        _add_instnorm_kernel,
        out_shape=jax.ShapeDtypeStruct((B, S, D), x1.dtype),
        grid_spec=pltpu.PrefetchScalarGridSpec(
            num_scalar_prefetch=0,
            grid=grid,
            in_specs=[
                pl.BlockSpec((tb, S, td), lambda b, j: (b, 0, j)),
                pl.BlockSpec((tb, S, td), lambda b, j: (b, 0, j)),
                pl.BlockSpec((1, td), lambda b, j: (0, j)),
                pl.BlockSpec((1, td), lambda b, j: (0, j)),
            ],
            out_specs=pl.BlockSpec((tb, S, td), lambda b, j: (b, 0, j)),
        ),
        compiler_params=pltpu.CompilerParams(
            dimension_semantics=("parallel", "parallel"),
            vmem_limit_bytes=vmem_limit,
        ),
    )(x1, x2, w2, b2)


def reference(x1, x2, weight, bias):
    """Pure-JAX reference mirroring the PyTorch module (two-pass variance)."""
    x = (x1 + x2).astype(jnp.float32)
    mean = jnp.mean(x, axis=1, keepdims=True)
    var = jnp.mean((x - mean) ** 2, axis=1, keepdims=True)
    y = (x - mean) / jnp.sqrt(var + EPS)
    return (y * weight[None, None, :] + bias[None, None, :]).astype(x1.dtype)


if __name__ == "__main__":
    key = jax.random.PRNGKey(0)
    k1, k2, k3, k4 = jax.random.split(key, 4)

    # Case 1: module-consistent small shape (embedding_dim=32 -> full-D block path).
    B, S, D = 2, 8, 32
    x1 = jax.random.normal(k1, (B, S, D), dtype=jnp.float32)
    x2 = jax.random.normal(k2, (B, S, D), dtype=jnp.float32)
    weight = jax.random.normal(k3, (D,), dtype=jnp.float32) * 0.1 + 1.0
    bias = jax.random.normal(k4, (D,), dtype=jnp.float32) * 0.1

    out = jax.block_until_ready(add_and_instance_norm(x1, x2, weight, bias))
    ref = reference(x1, x2, weight, bias)
    assert out.shape == (B, S, D)
    assert jnp.allclose(out, ref, atol=1e-4, rtol=1e-4), "mismatch vs reference (D=32)"

    # Case 2: lane-aligned shape (channel-tiled path).
    B2, S2, D2 = 2, 16, 256
    k5, k6, k7, k8 = jax.random.split(jax.random.PRNGKey(1), 4)
    y1 = jax.random.normal(k5, (B2, S2, D2), dtype=jnp.float32)
    y2 = jax.random.normal(k6, (B2, S2, D2), dtype=jnp.float32)
    w2_ = jax.random.normal(k7, (D2,), dtype=jnp.float32) * 0.1 + 1.0
    b2_ = jax.random.normal(k8, (D2,), dtype=jnp.float32) * 0.1

    out2 = jax.block_until_ready(add_and_instance_norm(y1, y2, w2_, b2_))
    ref2 = reference(y1, y2, w2_, b2_)
    assert out2.shape == (B2, S2, D2)
    assert jnp.allclose(out2, ref2, atol=1e-4, rtol=1e-4), "mismatch vs reference (D=256)"

    print("KERNEL_OK")
</pallas_src>

<mosaic_0001>
module attributes {stable_mosaic.version = 11 : i64} {
  func.func @_add_instnorm_kernel(%arg0: i32, %arg1: i32, %arg2: memref<2x8x32xf32, #tpu.memory_space<vmem>>, %arg3: memref<2x8x32xf32, #tpu.memory_space<vmem>>, %arg4: memref<1x32xf32, #tpu.memory_space<vmem>>, %arg5: memref<1x32xf32, #tpu.memory_space<vmem>>, %arg6: memref<2x8x32xf32, #tpu.memory_space<vmem>>) attributes {dimension_semantics = [#tpu.dimension_semantics<parallel>, #tpu.dimension_semantics<parallel>], iteration_bounds = array<i64: 1, 1>, scalar_prefetch = 0 : i64, scratch_operands = 0 : i64, tpu.core_type = #tpu.core_type<tc>, window_params = [{transform_indices = @transform_0, window_bounds = array<i64: 2, 8, 32>}, {transform_indices = @transform_1, window_bounds = array<i64: 2, 8, 32>}, {transform_indices = @transform_2, window_bounds = array<i64: 1, 32>}, {transform_indices = @transform_3, window_bounds = array<i64: 1, 32>}, {transform_indices = @transform_4, window_bounds = array<i64: 2, 8, 32>}]} {
    %c0 = arith.constant 0 : index
    %c0_0 = arith.constant 0 : index
    %c0_1 = arith.constant 0 : index
    %0 = vector.load %arg2[%c0, %c0_0, %c0_1] : memref<2x8x32xf32, #tpu.memory_space<vmem>>, vector<2x8x32xf32>
    %c0_2 = arith.constant 0 : index
    %c0_3 = arith.constant 0 : index
    %c0_4 = arith.constant 0 : index
    %1 = vector.load %arg3[%c0_2, %c0_3, %c0_4] : memref<2x8x32xf32, #tpu.memory_space<vmem>>, vector<2x8x32xf32>
    %2 = arith.addf %0, %1 : vector<2x8x32xf32>
    %cst = arith.constant dense<0.000000e+00> : vector<2x32xf32>
    %3 = vector.multi_reduction <add>, %2, %cst [1] : vector<2x8x32xf32> to vector<2x32xf32>
    %4 = vector.shape_cast %3 : vector<2x32xf32> to vector<2x1x32xf32>
    %5 = arith.mulf %2, %2 : vector<2x8x32xf32>
    %cst_5 = arith.constant dense<0.000000e+00> : vector<2x32xf32>
    %6 = vector.multi_reduction <add>, %5, %cst_5 [1] : vector<2x8x32xf32> to vector<2x32xf32>
    %7 = vector.shape_cast %6 : vector<2x32xf32> to vector<2x1x32xf32>
    %cst_6 = arith.constant 1.250000e-01 : f32
    %8 = vector.broadcast %cst_6 : f32 to vector<2x1x32xf32>
    %9 = arith.mulf %4, %8 : vector<2x1x32xf32>
    %cst_7 = arith.constant 1.250000e-01 : f32
    %10 = vector.broadcast %cst_7 : f32 to vector<2x1x32xf32>
    %11 = arith.mulf %7, %10 : vector<2x1x32xf32>
    %12 = arith.mulf %9, %9 : vector<2x1x32xf32>
    %13 = arith.subf %11, %12 : vector<2x1x32xf32>
    %cst_8 = arith.constant 0.000000e+00 : f32
    %14 = vector.broadcast %cst_8 : f32 to vector<2x1x32xf32>
    %15 = arith.maximumf %13, %14 : vector<2x1x32xf32>
    %c0_9 = arith.constant 0 : index
    %c0_10 = arith.constant 0 : index
    %16 = vector.load %arg4[%c0_9, %c0_10] : memref<1x32xf32, #tpu.memory_space<vmem>>, vector<1x32xf32>
    %17 = vector.shape_cast %16 : vector<1x32xf32> to vector<1x1x32xf32>
    %c0_11 = arith.constant 0 : index
    %c0_12 = arith.constant 0 : index
    %18 = vector.load %arg5[%c0_11, %c0_12] : memref<1x32xf32, #tpu.memory_space<vmem>>, vector<1x32xf32>
    %19 = vector.shape_cast %18 : vector<1x32xf32> to vector<1x1x32xf32>
    %cst_13 = arith.constant 9.99999974E-6 : f32
    %20 = vector.broadcast %cst_13 : f32 to vector<2x1x32xf32>
    %21 = arith.addf %15, %20 : vector<2x1x32xf32>
    %22 = math.rsqrt %21 : vector<2x1x32xf32>
    %23 = vector.broadcast %17 : vector<1x1x32xf32> to vector<2x1x32xf32>
    %24 = arith.mulf %23, %22 : vector<2x1x32xf32>
    %25 = arith.mulf %9, %24 : vector<2x1x32xf32>
    %26 = vector.broadcast %19 : vector<1x1x32xf32> to vector<2x1x32xf32>
    %27 = arith.subf %26, %25 : vector<2x1x32xf32>
    %28 = vector.broadcast %24 : vector<2x1x32xf32> to vector<2x8x32xf32>
    %29 = arith.mulf %2, %28 : vector<2x8x32xf32>
    %30 = vector.broadcast %27 : vector<2x1x32xf32> to vector<2x8x32xf32>
    %31 = arith.addf %29, %30 : vector<2x8x32xf32>
    %c0_14 = arith.constant 0 : index
    %c0_15 = arith.constant 0 : index
    %c0_16 = arith.constant 0 : index
    %32 = vector.load %arg6[%c0_14, %c0_15, %c0_16] : memref<2x8x32xf32, #tpu.memory_space<vmem>>, vector<2x8x32xf32>
    tpu.vector_store %arg6[%c0_14, %c0_15, %c0_16], %31 {strides = array<i32>} : memref<2x8x32xf32, #tpu.memory_space<vmem>>, vector<2x8x32xf32>,
    return
  }
  func.func @transform_0(%arg0: i32, %arg1: i32) -> (i32, i32, i32) {
    %c0_i32 = arith.constant 0 : i32
    %c0_i32_0 = arith.constant 0 : i32
    return %arg0, %c0_i32, %arg1 : i32, i32, i32
  }
  func.func @transform_1(%arg0: i32, %arg1: i32) -> (i32, i32, i32) {
    %c0_i32 = arith.constant 0 : i32
    %c0_i32_0 = arith.constant 0 : i32
    return %arg0, %c0_i32, %arg1 : i32, i32, i32
  }
  func.func @transform_2(%arg0: i32, %arg1: i32) -> (i32, i32) {
    %c0_i32 = arith.constant 0 : i32
    %c0_i32_0 = arith.constant 0 : i32
    return %c0_i32, %arg1 : i32, i32
  }
  func.func @transform_3(%arg0: i32, %arg1: i32) -> (i32, i32) {
    %c0_i32 = arith.constant 0 : i32
    %c0_i32_0 = arith.constant 0 : i32
    return %c0_i32, %arg1 : i32, i32
  }
  func.func @transform_4(%arg0: i32, %arg1: i32) -> (i32, i32, i32) {
    %c0_i32 = arith.constant 0 : i32
    %c0_i32_0 = arith.constant 0 : i32
    return %arg0, %c0_i32, %arg1 : i32, i32, i32
  }
}

</mosaic_0001>

<llo_original>
// kernel: tpu_custom_call.1
$region0: #{tpu_custom_call.1}
  #allocation0 [shape = 'u32[]', space=smem, size = 0x4, offset = 0x4, fixed_abs, tag = 'smem constant byte address 0x4 - core index']
  #allocation1 [shape = 'u32[144,128]{1,0:T(1,128)}', space=vmem, size = 0x12000, scoped, tag = 'internal scratch']
  %s0 = inlined_call_operand.hbm [shape: f32[2,8,32], index: 0, kind: input, shape index: {}]
  %s1 = inlined_call_operand.hbm [shape: f32[2,8,32], index: 1, kind: input, shape index: {}]
  %s2 = inlined_call_operand.vmem [shape: f32[1,32], index: 2, kind: input, shape index: {}]
  %s3 = inlined_call_operand.vmem [shape: f32[1,32], index: 3, kind: input, shape index: {}]
  %s4 = inlined_call_operand.hbm [shape: f32[2,8,32], index: 4, kind: output, shape index: {}]
  %s5 = sld [smem:[#allocation0]]
  $region34: #{tpu_custom_call.1} parent=0
    _
  %s7 = ssub.s32 1, %s5
  %s8 = scalar_select 0, %s7, %s5
  $region1: #{tpu_custom_call.1} parent=0
    #allocation2 [shape = 'u8[8192]{0}', space=vmem, size = 0x2000, scoped, tag = 'input window, operand 0, single buffered']
    #allocation3 [shape = 's32[1]{0}', space=sflag, size = 0x4, scoped, tag = 'scoped memory for tpu_custom_call.1']
    #allocation4 [shape = 's32[1]{0}', space=sflag, size = 0x4, scoped, tag = 'scoped memory for tpu_custom_call.1']
    #allocation5 [shape = 'u8[8192]{0}', space=vmem, size = 0x2000, scoped, tag = 'input window, operand 1, single buffered']
    #allocation6 [shape = 's32[1]{0}', space=sflag, size = 0x4, scoped, tag = 'scoped memory for tpu_custom_call.1']
    #allocation7 [shape = 'u8[8192]{0}', space=vmem, size = 0x2000, scoped, tag = 'output window, operand 0, single buffered']
    %9 = vsyncpa [#allocation3], 0
    %10 = vsyncpa [#allocation6], 0
    %11 = vsyncpa [#allocation4], 0
    // Predicated region
    $region2: #{tpu_custom_call.1} parent=1 // pred_check
      _
    $region3: #{tpu_custom_call.1} parent=1 // pred_check_branch
      %13 = sbr.rel (0) target = $region5
    $region4: #{tpu_custom_call.1} parent=1 // pred_region
      %s15 = ssub.s32 256, 256
      %16 = vsyncadd [#allocation3], %s15
      %s17 = sshll.u32 [#allocation2], 4
      %s18 = int_to_ptr.vmem [resolvable:$true] %s17
      %23 = dma.hbm_to_vmem [thread:$0]  %s0, 256, %s18, [#allocation3], 128, 128, 8
    $region5: #{tpu_custom_call.1} parent=1 // pred_fallthru
      _
    // Predicated region
    $region6: #{tpu_custom_call.1} parent=1 // pred_check
      _
    $region7: #{tpu_custom_call.1} parent=1 // pred_check_branch
      %25 = sbr.rel (0) target = $region9
    $region8: #{tpu_custom_call.1} parent=1 // pred_region
      %s27 = ssub.s32 256, 256
      %28 = vsyncadd [#allocation6], %s27
      %s29 = sshll.u32 [#allocation5], 4
      %s30 = int_to_ptr.vmem [resolvable:$true] %s29
      %35 = dma.hbm_to_vmem [thread:$0]  %s1, 256, %s30, [#allocation6], 128, 128, 8
    $region9: #{tpu_custom_call.1} parent=1 // pred_fallthru
      _
    // Predicated region
    $region10: #{tpu_custom_call.1} parent=1 // pred_check
      _
    $region11: #{tpu_custom_call.1} parent=1 // pred_check_branch
      %37 = sbr.rel (0) target = $region13
    $region12: #{tpu_custom_call.1} parent=1 // pred_region
      _
    $region13: #{tpu_custom_call.1} parent=1 // pred_fallthru
      _
    // Predicated region
    $region14: #{tpu_custom_call.1} parent=1 // pred_check
      _
    $region15: #{tpu_custom_call.1} parent=1 // pred_check_branch
      %39 = sbr.rel (0) target = $region17
    $region16: #{tpu_custom_call.1} parent=1 // pred_region
      _
    $region17: #{tpu_custom_call.1} parent=1 // pred_fallthru
      _
    // Predicated region
    $region18: #{tpu_custom_call.1} parent=1 // pred_check
      _
    $region19: #{tpu_custom_call.1} parent=1 // pred_check_branch
      %41 = sbr.rel (0) target = $region21
    $region20: #{tpu_custom_call.1} parent=1 // pred_region
      %42 = dma.done [#allocation3], 256
    $region21: #{tpu_custom_call.1} parent=1 // pred_fallthru
      _
    // Predicated region
    $region22: #{tpu_custom_call.1} parent=1 // pred_check
      _
    $region23: #{tpu_custom_call.1} parent=1 // pred_check_branch
      %44 = sbr.rel (0) target = $region25
    $region24: #{tpu_custom_call.1} parent=1 // pred_region
      %45 = dma.done [#allocation6], 256
    $region25: #{tpu_custom_call.1} parent=1 // pred_fallthru
      _
    %v46 = vld [vmem:[#allocation2] sm:$0xff]
    %v47 = vld [vmem:[#allocation2 + $0x8] sm:$0xff]
    %v48 = vld [vmem:[#allocation5] sm:$0xff]
    %v49 = vld [vmem:[#allocation5 + $0x8] sm:$0xff]
    %v50 = vadd.f32 %v46, %v48
    %v51 = vadd.f32 %v47, %v49
    %vm52 = vcmask 261120
    %v53 = vsel %vm52, %v50, 0.0
    %v54 = vrot.slane %v53, 4
    %v55 = vadd.f32 %v53, %v54
    %v56 = vrot.slane %v55, 2
    %v57 = vadd.f32 %v55, %v56
    %v58 = vrot.slane %v57, 1
    %v59 = vadd.f32 %v57, %v58
    %v60 = vsel %vm52, %v51, 0.0
    %v61 = vrot.slane %v60, 4
    %v62 = vadd.f32 %v60, %v61
    %v63 = vrot.slane %v62, 2
    %v64 = vadd.f32 %v62, %v63
    %v65 = vrot.slane %v64, 1
    %v66 = vadd.f32 %v64, %v65
    %v67 = vmul.f32 %v50, %v50
    %v68 = vmul.f32 %v51, %v51
    %v69 = vsel %vm52, %v67, 0.0
    %v70 = vrot.slane %v69, 4
    %v71 = vadd.f32 %v69, %v70
    %v72 = vrot.slane %v71, 2
    %v73 = vadd.f32 %v71, %v72
    %v74 = vrot.slane %v73, 1
    %v75 = vadd.f32 %v73, %v74
    %v76 = vsel %vm52, %v68, 0.0
    %v77 = vrot.slane %v76, 4
    %v78 = vadd.f32 %v76, %v77
    %v79 = vrot.slane %v78, 2
    %v80 = vadd.f32 %v78, %v79
    %v81 = vrot.slane %v80, 1
    %v82 = vadd.f32 %v80, %v81
    %v83 = vmul.f32 %v59, 0.125
    %v84 = vmul.f32 %v66, 0.125
    %v85 = vmul.f32 %v75, 0.125
    %v86 = vmul.f32 %v82, 0.125
    %v87 = vmul.f32 %v83, %v83
    %v88 = vmul.f32 %v84, %v84
    %v89 = vsub.f32 %v85, %v87
    %v90 = vsub.f32 %v86, %v88
    %v91 = vmax.f32 %v89, 0.0
    %v92 = vmax.f32 %v90, 0.0
    %v93 = vld [vmem:[%s2] sm:$0x1]
    %v94 = vld [vmem:[%s3] sm:$0x1]
    %v95 = vadd.f32 %v91, 1e-05
    %v96 = vadd.f32 %v92, 1e-05
    %v97 = vrsqrt.pop %v95
    %v98 = vrsqrt.pop %v96
    %v99 = vmul.f32 %v93, %v97
    %v100 = vmul.f32 %v93, %v98
    %v101 = vmul.f32 %v83, %v99
    %v102 = vmul.f32 %v84, %v100
    %v103 = vsub.f32 %v94, %v101
    %v104 = vsub.f32 %v94, %v102
    %v107 = vlaneseq
    %v108 = vshrl.u32 %v107, 7
    %v109 = vsub.s32 0, %v108
    %v110 = vrot.slane %v99, %v109
    %v111 = vlaneseq
    %v112 = vshrl.u32 %v111, 7
    %v113 = vsub.s32 0, %v112
    %v114 = vrot.slane %v100, %v113
    %v117 = vmul.f32 %v50, %v110
    %v118 = vmul.f32 %v51, %v114
    %v121 = vlaneseq
    %v122 = vshrl.u32 %v121, 7
    %v123 = vsub.s32 0, %v122
    %v124 = vrot.slane %v103, %v123
    %v125 = vlaneseq
    %v126 = vshrl.u32 %v125, 7
    %v127 = vsub.s32 0, %v126
    %v128 = vrot.slane %v104, %v127
    %v131 = vadd.f32 %v117, %v124
    %v132 = vadd.f32 %v118, %v128
    %133 = vst.msk [vmem:[#allocation7] sm:$0xff] %vm52, %v131
    %134 = vst.msk [vmem:[#allocation7 + $0x8] sm:$0xff] %vm52, %v132
    // Predicated region
    $region26: #{tpu_custom_call.1} parent=1 // pred_check
      _
    $region27: #{tpu_custom_call.1} parent=1 // pred_check_branch
      %136 = sbr.rel (0) target = $region29
    $region28: #{tpu_custom_call.1} parent=1 // pred_region
      %s138 = ssub.s32 256, 256
      %139 = vsyncadd [#allocation4], %s138
      %s140 = sshll.u32 [#allocation7], 4
      %s141 = int_to_ptr.vmem [resolvable:$true] %s140
      %146 = dma.vmem_to_hbm [thread:$0]  %s141, 256, %s4, [#allocation4], 128, 128, 8
    $region29: #{tpu_custom_call.1} parent=1 // pred_fallthru
      _
    // Predicated region
    $region30: #{tpu_custom_call.1} parent=1 // pred_check
      _
    $region31: #{tpu_custom_call.1} parent=1 // pred_check_branch
      %148 = sbr.rel (0) target = $region33
    $region32: #{tpu_custom_call.1} parent=1 // pred_region
      %149 = dma.done [#allocation4], 256
    $region33: #{tpu_custom_call.1} parent=1 // pred_fallthru
      _
    %150 = vsyncpa [#allocation3], 1
    %151 = vsyncpa [#allocation6], 1
    %152 = vsyncpa [#allocation4], 1

</llo_original>
